<compile_context>
chip_gen: v7x
topology: tpu7x:2x2x1
jax: 0.10.0
libtpu: 0.0.40
codegen_flags: <defaults>
</compile_context>

<pallas_src>
import math

import jax
import jax.numpy as jnp
from jax.experimental import pallas as pl
from jax.experimental.pallas import tpu as pltpu


_NEG_BIG = -1e30       # finite "minus infinity" (avoids inf-inf NaNs)
_TINY = 1e-37          # clamp for fully-underflowed sums (no log(0)/0-div)
_NORM_EPS = 1e-12      # epsilon so zero-padded rows normalize to 0 instead of NaN


# -----------------------------------------------------------------------------
# Pallas kernel: one image-row tile of the soft CLIP loss -> per-tile partials
# -----------------------------------------------------------------------------
def _soft_clip_loss_kernel(shift_ref, cnt_ref,
                           img_emb_ref, txt_embT_ref, img_lab_ref, txt_labT_ref,
                           part_ref):
    """Writes per-tile partial sums into an (8, bt_pad) lane-dense block:
       row 0: sum_i exp(logits_ij - M_l)               (caption LSE accumulator)
       row 1: sum_i exp(lsim_ij  - M_t)                (caption target denominator)
       row 2: sum_i exp(lsim_ij  - M_t) * logits_ij    (caption target numerator)
       row 3: broadcast of this tile's summed image-row losses
       rows 4-7: zeros (padding to the (8,128) tile constraint)
    """
    i = pl.program_id(0)
    tq = img_emb_ref.shape[0]        # image rows in this tile (padded)
    bt = txt_embT_ref.shape[1]       # padded text batch (lane dimension)

    m_l = shift_ref[0]               # fixed shift >= any possible logit
    m_t = shift_ref[1]               # fixed shift >= any possible label similarity
    n_img = cnt_ref[0]
    n_txt = cnt_ref[1]

    # validity of padded image rows / padded text columns
    row_ids = i * tq + jax.lax.broadcasted_iota(jnp.int32, (tq, 1), 0)
    row_valid = row_ids < n_img                                   # (tq, 1) bool
    col_ids = jax.lax.broadcasted_iota(jnp.int32, (1, bt), 1)
    col_bias = jnp.where(col_ids < n_txt, 0.0, _NEG_BIG)          # (1, bt) f32

    # bf16 MXU matmuls with f32 accumulation; scale is already folded into the image
    # embeddings and the text operands are pre-transposed (no per-step transpose).
    logits = jax.lax.dot_general(img_emb_ref[...], txt_embT_ref[...],
                                 (((1,), (0,)), ((), ())),
                                 preferred_element_type=jnp.float32)
    lsim = jax.lax.dot_general(img_lab_ref[...], txt_labT_ref[...],
                               (((1,), (0,)), ((), ())),
                               preferred_element_type=jnp.float32)

    lb = logits + col_bias           # additive masking (no full-tile where-copies)
    tb = lsim + col_bias

    # ---- image (row) direction: exact per-row shifted softmax; one exp per matrix.
    rmax_l = jnp.max(lb, axis=-1, keepdims=True)                  # (tq, 1)
    e_l = jnp.exp(lb - rmax_l)                                    # full-tile exp #1
    lse_r = rmax_l + jnp.log(jnp.sum(e_l, axis=-1, keepdims=True))

    rmax_t = jnp.max(tb, axis=-1, keepdims=True)
    e_t = jnp.exp(tb - rmax_t)                                    # full-tile exp #2
    tsum_r = jnp.sum(e_t, axis=-1, keepdims=True)
    pt_logit = e_t * logits                                       # reused for a_col
    wsum_r = jnp.sum(pt_logit, axis=-1, keepdims=True)
    row_loss = lse_r - wsum_r / jnp.maximum(tsum_r, _TINY)
    img_part = jnp.sum(jnp.where(row_valid, row_loss, 0.0),
                       axis=0, keepdims=True)                     # (1, 1)

    # ---- caption (column) direction: reuse the SAME exp tiles via per-row
    #      reweighting to the fixed global shifts (no extra full-tile exps,
    #      no online max / rescale state).  Padded rows get weight 0.
    row_f = row_valid.astype(jnp.float32)
    w_l = jnp.exp(rmax_l - m_l) * row_f                           # (tq, 1), <= ~1
    w_t = jnp.exp(rmax_t - m_t) * row_f
    l_col = jnp.sum(e_l * w_l, axis=0, keepdims=True)             # (1, bt)
    t_col = jnp.sum(e_t * w_t, axis=0, keepdims=True)
    a_col = jnp.sum(pt_logit * w_t, axis=0, keepdims=True)

    part_ref[0:1, :] = l_col
    part_ref[1:2, :] = t_col
    part_ref[2:3, :] = a_col
    part_ref[3:4, :] = jnp.broadcast_to(img_part, (1, bt))
    part_ref[4:8, :] = jnp.zeros((4, bt), jnp.float32)


def _round_up(x, m):
    return ((x + m - 1) // m) * m


def soft_clip_loss(img_embeds, text_embeds, img_labels, text_labels, logit_scale,
                   *, row_tile=256):
    """MedCLIP soft CLIP loss via a row-tiled Pallas kernel emitting per-tile partials."""
    bi, d = img_embeds.shape
    bt = text_embeds.shape[0]
    c = img_labels.shape[1]

    d_pad = _round_up(d, 128)                  # lane-align contraction dims
    c_pad = _round_up(c, 128)
    bt_pad = _round_up(bt, 128)                # lane dim of the logits tile / partials
    tq = _round_up(min(row_tile, bi), 16)      # bf16 sublane-aligned row tile
    bi_pad = _round_up(bi, tq)
    n_steps = bi_pad // tq

    # clamp(logit_scale, 0, 4.6052).exp()  (MedCLIP compute_logits)
    scale = jnp.exp(jnp.clip(logit_scale.astype(jnp.float32), 0.0, 4.6052))

    # f32 L2 normalization (hoisted out of the kernel); fold scale into image side;
    # cast normalized results to bf16 for the MXU.
    img_f = img_embeds.astype(jnp.float32)
    img_n = img_f * (scale * jax.lax.rsqrt(
        jnp.sum(img_f * img_f, axis=-1, keepdims=True) + _NORM_EPS))
    txt_f = text_embeds.astype(jnp.float32)
    txt_n = txt_f * jax.lax.rsqrt(
        jnp.sum(txt_f * txt_f, axis=-1, keepdims=True) + _NORM_EPS)

    img_lab_f = img_labels.astype(jnp.float32)
    txt_lab_f = text_labels.astype(jnp.float32)

    def pad2(x, rows, cols):
        return jnp.pad(x, ((0, rows - x.shape[0]),
                           (0, cols - x.shape[1]))).astype(jnp.bfloat16)

    img_e = pad2(img_n, bi_pad, d_pad)                      # (bi_pad, d_pad)
    txt_eT = pad2(txt_n, bt_pad, d_pad).T                   # (d_pad, bt_pad), resident
    img_la = pad2(img_lab_f, bi_pad, c_pad)                 # (bi_pad, c_pad)
    txt_laT = pad2(txt_lab_f, bt_pad, c_pad).T              # (c_pad, bt_pad), resident

    # Fixed shifts for the caption-direction accumulators:
    #   logits are bounded by scale * (|cos| <= ~1);  label_sim by the norm product.
    m_l = 1.05 * scale + 1e-3
    m_t = (jnp.max(jnp.linalg.norm(img_lab_f, axis=-1)) *
           jnp.max(jnp.linalg.norm(txt_lab_f, axis=-1)) + 1.0)
    shifts = jnp.stack([m_l, m_t]).astype(jnp.float32)
    counts = jnp.array([bi, bt], jnp.int32)

    parts = pl.pallas_call(
        _soft_clip_loss_kernel,
        out_shape=jax.ShapeDtypeStruct((8 * n_steps, bt_pad), jnp.float32),
        grid=(n_steps,),
        in_specs=[
            pl.BlockSpec(memory_space=pltpu.MemorySpace.SMEM),    # shifts [M_l, M_t]
            pl.BlockSpec(memory_space=pltpu.MemorySpace.SMEM),    # counts [bi, bt]
            pl.BlockSpec((tq, d_pad), lambda i: (i, 0)),          # img embeds tile
            pl.BlockSpec((d_pad, bt_pad), lambda i: (0, 0)),      # txt embeds^T (resident)
            pl.BlockSpec((tq, c_pad), lambda i: (i, 0)),          # img labels tile
            pl.BlockSpec((c_pad, bt_pad), lambda i: (0, 0)),      # txt labels^T (resident)
        ],
        out_specs=pl.BlockSpec((8, bt_pad), lambda i: (i, 0)),    # per-tile partials
        compiler_params=pltpu.CompilerParams(
            # No cross-step state -> row axis is fully parallel (both v7x TCs usable).
            dimension_semantics=("parallel",),
            vmem_limit_bytes=48 * 1024 * 1024,
        ),
    )(shifts, counts, img_e, txt_eT, img_la, txt_laT)

    # ---- tiny JAX epilogue: merge per-tile partials and finalize the scalar loss ----
    parts = parts.reshape(n_steps, 8, bt_pad)
    l_col = jnp.sum(parts[:, 0, :], axis=0)[:bt]
    t_col = jnp.sum(parts[:, 1, :], axis=0)[:bt]
    a_col = jnp.sum(parts[:, 2, :], axis=0)[:bt]
    img_total = jnp.sum(parts[:, 3, 0])

    # clamp guards only matter if a whole column underflowed (needs logit_scale at its
    # 4.6052 cap AND a column ~88 below the global max); they prevent log(0)/0-div.
    lse_col = m_l + jnp.log(jnp.maximum(l_col, _TINY))
    col_loss = lse_col - a_col / jnp.maximum(t_col, _TINY)

    image_loss = img_total / bi
    caption_loss = jnp.sum(col_loss) / bt
    return 0.5 * (image_loss + caption_loss)


# -----------------------------------------------------------------------------
# Synthetic "model" (deterministic params) — plain JAX glue
# -----------------------------------------------------------------------------
def make_params(key, *, c=3, h=16, w=16, vocab=32, embed_dim=32):
    k1, k2, k3 = jax.random.split(key, 3)
    return {
        "w_img": jax.random.normal(k1, (c * h * w, embed_dim), jnp.float32) * 0.02,
        "tok_emb": jax.random.normal(k2, (vocab, embed_dim), jnp.float32) * 0.02,
        "w_txt": jax.random.normal(k3, (embed_dim, embed_dim), jnp.float32) * 0.02,
        "logit_scale": jnp.array(math.log(1.0 / 0.07), jnp.float32),
    }


def encode_image(params, pixel_values):
    b = pixel_values.shape[0]
    x = pixel_values.reshape(b, -1).astype(jnp.float32)
    return x @ params["w_img"]


def encode_text(params, input_ids, attention_mask):
    emb = params["tok_emb"][input_ids]                       # (B, S, D)
    mask = attention_mask.astype(jnp.float32)[..., None]     # (B, S, 1)
    pooled = (emb * mask).sum(1) / jnp.maximum(mask.sum(1), 1.0)
    return pooled @ params["w_txt"]


def image_text_contrastive_loss(params, input_ids=None, pixel_values=None,
                                attention_mask=None, img_labels=None,
                                text_labels=None):
    """Mirrors ImageTextContrastiveLoss.forward (soft CLIP loss branch)."""
    if img_labels is None or text_labels is None:
        # TODO(synk): hard CLIP loss path (model(return_loss=True)) not implemented.
        raise NotImplementedError("hard clip loss path not implemented")
    # TODO(synk): aug_input_ids augmentation branch not implemented.
    img_embeds = encode_image(params, pixel_values)
    text_embeds = encode_text(params, input_ids, attention_mask)
    loss = soft_clip_loss(img_embeds, text_embeds, img_labels, text_labels,
                          params["logit_scale"])
    return {"loss_value": loss}


# -----------------------------------------------------------------------------
# Pure-JAX f32 reference for verification
# -----------------------------------------------------------------------------
def _reference_loss(params, input_ids, pixel_values, attention_mask,
                    img_labels, text_labels):
    img = encode_image(params, pixel_values)
    txt = encode_text(params, input_ids, attention_mask)
    img = img / jnp.linalg.norm(img, axis=-1, keepdims=True)
    txt = txt / jnp.linalg.norm(txt, axis=-1, keepdims=True)
    scale = jnp.exp(jnp.clip(params["logit_scale"], 0.0, 4.6052))
    logits = scale * (img @ txt.T)
    label_sim = img_labels.astype(jnp.float32) @ text_labels.astype(jnp.float32).T

    def soft_xent(inp, tgt):
        lp = jax.nn.log_softmax(inp, axis=1)
        return -(tgt * lp).sum() / inp.shape[0]

    il = soft_xent(logits, jax.nn.softmax(label_sim, axis=1))
    cl = soft_xent(logits.T, jax.nn.softmax(label_sim.T, axis=1))
    return (il + cl) / 2.0


if __name__ == "__main__":
    B, C, H, W = 8, 3, 16, 16
    SEQ, VOCAB, D, NCLS = 8, 32, 32, 4

    key = jax.random.PRNGKey(0)
    kp, k1, k2, k3, k4, k5 = jax.random.split(key, 6)

    params = make_params(kp, c=C, h=H, w=W, vocab=VOCAB, embed_dim=D)

    pixel_values = jax.random.normal(k1, (B, C, H, W), jnp.float32)      # NCHW
    input_ids = jax.random.randint(k2, (B, SEQ), 0, VOCAB)
    attention_mask = (jax.random.uniform(k3, (B, SEQ)) > 0.2).astype(jnp.int32)
    img_labels = jax.random.randint(k4, (B, NCLS), -1, 2).astype(jnp.float32)
    text_labels = jax.random.randint(k5, (B, NCLS), -1, 2).astype(jnp.float32)

    out = image_text_contrastive_loss(
        params, input_ids=input_ids, pixel_values=pixel_values,
        attention_mask=attention_mask, img_labels=img_labels,
        text_labels=text_labels)
    loss = jax.block_until_ready(out["loss_value"])

    ref = _reference_loss(params, input_ids, pixel_values, attention_mask,
                          img_labels, text_labels)
    # normalized embeddings are cast to bf16 for the MXU -> loss-appropriate tolerance
    assert jnp.allclose(loss, ref, rtol=2e-2, atol=2e-2), (loss, ref)

    print("KERNEL_OK")
</pallas_src>

<mosaic_0001>
module attributes {stable_mosaic.version = 11 : i64} {
  func.func @_soft_clip_loss_kernel(%arg0: i32, %arg1: memref<2xf32, #tpu.memory_space<smem>>, %arg2: memref<2xi32, #tpu.memory_space<smem>>, %arg3: memref<16x128xbf16, #tpu.memory_space<vmem>>, %arg4: memref<128x128xbf16, #tpu.memory_space<vmem>>, %arg5: memref<16x128xbf16, #tpu.memory_space<vmem>>, %arg6: memref<128x128xbf16, #tpu.memory_space<vmem>>, %arg7: memref<8x128xf32, #tpu.memory_space<vmem>>) attributes {dimension_semantics = [#tpu.dimension_semantics<parallel>], iteration_bounds = array<i64: 1>, scalar_prefetch = 0 : i64, scratch_operands = 0 : i64, tpu.core_type = #tpu.core_type<tc>, window_params = [{transform_indices = @transform_0, window_bounds = array<i64: 2>}, {transform_indices = @transform_1, window_bounds = array<i64: 2>}, {transform_indices = @transform_2, window_bounds = array<i64: 16, 128>}, {pipeline_mode = #tpu.pipeline_mode<synchronous>, transform_indices = @transform_3, window_bounds = array<i64: 128, 128>}, {transform_indices = @transform_4, window_bounds = array<i64: 16, 128>}, {pipeline_mode = #tpu.pipeline_mode<synchronous>, transform_indices = @transform_5, window_bounds = array<i64: 128, 128>}, {transform_indices = @transform_6, window_bounds = array<i64: 8, 128>}]} {
    %c0 = arith.constant 0 : index
    %0 = memref.load %arg1[%c0] : memref<2xf32, #tpu.memory_space<smem>>
    %c1 = arith.constant 1 : index
    %1 = memref.load %arg1[%c1] : memref<2xf32, #tpu.memory_space<smem>>
    %c0_0 = arith.constant 0 : index
    %2 = memref.load %arg2[%c0_0] : memref<2xi32, #tpu.memory_space<smem>>
    %c1_1 = arith.constant 1 : index
    %3 = memref.load %arg2[%c1_1] : memref<2xi32, #tpu.memory_space<smem>>
    %c16_i32 = arith.constant 16 : i32
    %4 = arith.muli %arg0, %c16_i32 : i32
    %5 = tpu.iota {dimensions = array<i32: 0>} : vector<16x1xi32>
    %6 = vector.broadcast %4 : i32 to vector<16x1xi32>
    %7 = arith.addi %6, %5 : vector<16x1xi32>
    %8 = vector.broadcast %2 : i32 to vector<16x1xi32>
    %9 = arith.cmpi slt, %7, %8 : vector<16x1xi32>
    %10 = tpu.iota {dimensions = array<i32: 1>} : vector<1x128xi32>
    %11 = vector.broadcast %3 : i32 to vector<1x128xi32>
    %12 = arith.cmpi slt, %10, %11 : vector<1x128xi32>
    %cst = arith.constant 0.000000e+00 : f32
    %cst_2 = arith.constant -1.000000e+30 : f32
    %13 = vector.broadcast %cst : f32 to vector<1x128xf32>
    %14 = vector.broadcast %cst_2 : f32 to vector<1x128xf32>
    %15 = arith.select %12, %13, %14 : vector<1x128xi1>, vector<1x128xf32>
    %c0_3 = arith.constant 0 : index
    %c0_4 = arith.constant 0 : index
    %16 = vector.load %arg3[%c0_3, %c0_4] : memref<16x128xbf16, #tpu.memory_space<vmem>>, vector<16x128xbf16>
    %c0_5 = arith.constant 0 : index
    %c0_6 = arith.constant 0 : index
    %17 = vector.load %arg4[%c0_5, %c0_6] : memref<128x128xbf16, #tpu.memory_space<vmem>>, vector<128x128xbf16>
    %cst_7 = arith.constant dense<0.000000e+00> : vector<16x128xf32>
    %18 = tpu.matmul %16, %17, %cst_7 {dimension_numbers = #tpu.dot_dimension_numbers<[1], [0], [0], [1], [0, 0, 1, 1], [], []>} : vector<16x128xbf16>, vector<128x128xbf16>, vector<16x128xf32> -> vector<16x128xf32>
    %c0_8 = arith.constant 0 : index
    %c0_9 = arith.constant 0 : index
    %19 = vector.load %arg5[%c0_8, %c0_9] : memref<16x128xbf16, #tpu.memory_space<vmem>>, vector<16x128xbf16>
    %c0_10 = arith.constant 0 : index
    %c0_11 = arith.constant 0 : index
    %20 = vector.load %arg6[%c0_10, %c0_11] : memref<128x128xbf16, #tpu.memory_space<vmem>>, vector<128x128xbf16>
    %cst_12 = arith.constant dense<0.000000e+00> : vector<16x128xf32>
    %21 = tpu.matmul %19, %20, %cst_12 {dimension_numbers = #tpu.dot_dimension_numbers<[1], [0], [0], [1], [0, 0, 1, 1], [], []>} : vector<16x128xbf16>, vector<128x128xbf16>, vector<16x128xf32> -> vector<16x128xf32>
    %22 = vector.broadcast %15 : vector<1x128xf32> to vector<16x128xf32>
    %23 = arith.addf %18, %22 : vector<16x128xf32>
    %24 = vector.broadcast %15 : vector<1x128xf32> to vector<16x128xf32>
    %25 = arith.addf %21, %24 : vector<16x128xf32>
    %cst_13 = arith.constant dense<0xFF800000> : vector<16xf32>
    %26 = vector.multi_reduction <maximumf>, %23, %cst_13 [1] : vector<16x128xf32> to vector<16xf32>
    %27 = vector.shape_cast %26 : vector<16xf32> to vector<16x1xf32>
    %28 = vector.broadcast %27 : vector<16x1xf32> to vector<16x128xf32>
    %29 = arith.subf %23, %28 : vector<16x128xf32>
    %30 = math.exp %29 : vector<16x128xf32>
    %cst_14 = arith.constant dense<0.000000e+00> : vector<16xf32>
    %31 = vector.multi_reduction <add>, %30, %cst_14 [1] : vector<16x128xf32> to vector<16xf32>
    %32 = vector.shape_cast %31 : vector<16xf32> to vector<16x1xf32>
    %33 = math.log %32 : vector<16x1xf32>
    %34 = arith.addf %27, %33 : vector<16x1xf32>
    %cst_15 = arith.constant dense<0xFF800000> : vector<16xf32>
    %35 = vector.multi_reduction <maximumf>, %25, %cst_15 [1] : vector<16x128xf32> to vector<16xf32>
    %36 = vector.shape_cast %35 : vector<16xf32> to vector<16x1xf32>
    %37 = vector.broadcast %36 : vector<16x1xf32> to vector<16x128xf32>
    %38 = arith.subf %25, %37 : vector<16x128xf32>
    %39 = math.exp %38 : vector<16x128xf32>
    %cst_16 = arith.constant dense<0.000000e+00> : vector<16xf32>
    %40 = vector.multi_reduction <add>, %39, %cst_16 [1] : vector<16x128xf32> to vector<16xf32>
    %41 = vector.shape_cast %40 : vector<16xf32> to vector<16x1xf32>
    %42 = arith.mulf %39, %18 : vector<16x128xf32>
    %cst_17 = arith.constant dense<0.000000e+00> : vector<16xf32>
    %43 = vector.multi_reduction <add>, %42, %cst_17 [1] : vector<16x128xf32> to vector<16xf32>
    %44 = vector.shape_cast %43 : vector<16xf32> to vector<16x1xf32>
    %cst_18 = arith.constant 9.99999991E-38 : f32
    %45 = vector.broadcast %cst_18 : f32 to vector<16x1xf32>
    %46 = arith.maximumf %41, %45 : vector<16x1xf32>
    %47 = arith.divf %44, %46 : vector<16x1xf32>
    %48 = arith.subf %34, %47 : vector<16x1xf32>
    %cst_19 = arith.constant 0.000000e+00 : f32
    %49 = vector.broadcast %cst_19 : f32 to vector<16x1xf32>
    %50 = arith.select %9, %48, %49 : vector<16x1xi1>, vector<16x1xf32>
    %cst_20 = arith.constant dense<0.000000e+00> : vector<1xf32>
    %51 = vector.multi_reduction <add>, %50, %cst_20 [0] : vector<16x1xf32> to vector<1xf32>
    %52 = vector.shape_cast %51 : vector<1xf32> to vector<1x1xf32>
    %53 = arith.extui %9 : vector<16x1xi1> to vector<16x1xi32>
    %54 = arith.sitofp %53 : vector<16x1xi32> to vector<16x1xf32>
    %55 = vector.broadcast %0 : f32 to vector<16x1xf32>
    %56 = arith.subf %27, %55 : vector<16x1xf32>
    %57 = math.exp %56 : vector<16x1xf32>
    %58 = arith.mulf %57, %54 : vector<16x1xf32>
    %59 = vector.broadcast %1 : f32 to vector<16x1xf32>
    %60 = arith.subf %36, %59 : vector<16x1xf32>
    %61 = math.exp %60 : vector<16x1xf32>
    %62 = arith.mulf %61, %54 : vector<16x1xf32>
    %63 = vector.broadcast %58 : vector<16x1xf32> to vector<16x128xf32>
    %64 = arith.mulf %30, %63 : vector<16x128xf32>
    %cst_21 = arith.constant dense<0.000000e+00> : vector<128xf32>
    %65 = vector.multi_reduction <add>, %64, %cst_21 [0] : vector<16x128xf32> to vector<128xf32>
    %66 = vector.shape_cast %65 : vector<128xf32> to vector<1x128xf32>
    %67 = vector.broadcast %62 : vector<16x1xf32> to vector<16x128xf32>
    %68 = arith.mulf %39, %67 : vector<16x128xf32>
    %cst_22 = arith.constant dense<0.000000e+00> : vector<128xf32>
    %69 = vector.multi_reduction <add>, %68, %cst_22 [0] : vector<16x128xf32> to vector<128xf32>
    %70 = vector.shape_cast %69 : vector<128xf32> to vector<1x128xf32>
    %71 = vector.broadcast %62 : vector<16x1xf32> to vector<16x128xf32>
    %72 = arith.mulf %42, %71 : vector<16x128xf32>
    %cst_23 = arith.constant dense<0.000000e+00> : vector<128xf32>
    %73 = vector.multi_reduction <add>, %72, %cst_23 [0] : vector<16x128xf32> to vector<128xf32>
    %74 = vector.shape_cast %73 : vector<128xf32> to vector<1x128xf32>
    %c0_24 = arith.constant 0 : index
    %c0_25 = arith.constant 0 : index
    %75 = vector.load %arg7[%c0_24, %c0_25] : memref<8x128xf32, #tpu.memory_space<vmem>>, vector<1x128xf32>
    tpu.vector_store %arg7[%c0_24, %c0_25], %66 {strides = array<i32>} : memref<8x128xf32, #tpu.memory_space<vmem>>, vector<1x128xf32>,
    %c1_26 = arith.constant 1 : index
    %c0_27 = arith.constant 0 : index
    %76 = vector.load %arg7[%c1_26, %c0_27] : memref<8x128xf32, #tpu.memory_space<vmem>>, vector<1x128xf32>
    tpu.vector_store %arg7[%c1_26, %c0_27], %70 {strides = array<i32>} : memref<8x128xf32, #tpu.memory_space<vmem>>, vector<1x128xf32>,
    %c2 = arith.constant 2 : index
    %c0_28 = arith.constant 0 : index
    %77 = vector.load %arg7[%c2, %c0_28] : memref<8x128xf32, #tpu.memory_space<vmem>>, vector<1x128xf32>
    tpu.vector_store %arg7[%c2, %c0_28], %74 {strides = array<i32>} : memref<8x128xf32, #tpu.memory_space<vmem>>, vector<1x128xf32>,
    %78 = vector.shape_cast %52 : vector<1x1xf32> to vector<1x1xf32>
    %79 = vector.broadcast %78 : vector<1x1xf32> to vector<1x128xf32>
    %c3 = arith.constant 3 : index
    %c0_29 = arith.constant 0 : index
    %80 = vector.load %arg7[%c3, %c0_29] : memref<8x128xf32, #tpu.memory_space<vmem>>, vector<1x128xf32>
    tpu.vector_store %arg7[%c3, %c0_29], %79 {strides = array<i32>} : memref<8x128xf32, #tpu.memory_space<vmem>>, vector<1x128xf32>,
    %cst_30 = arith.constant 0.000000e+00 : f32
    %81 = vector.broadcast %cst_30 : f32 to vector<4x128xf32>
    %c4 = arith.constant 4 : index
    %c0_31 = arith.constant 0 : index
    %82 = vector.load %arg7[%c4, %c0_31] : memref<8x128xf32, #tpu.memory_space<vmem>>, vector<4x128xf32>
    tpu.vector_store %arg7[%c4, %c0_31], %81 {strides = array<i32>} : memref<8x128xf32, #tpu.memory_space<vmem>>, vector<4x128xf32>,
    return
  }
  func.func @transform_0(%arg0: i32) -> i32 {
    %c0_i32 = arith.constant 0 : i32
    %c0_i32_0 = arith.constant 0 : i32
    return %c0_i32 : i32
  }
  func.func @transform_1(%arg0: i32) -> i32 {
    %c0_i32 = arith.constant 0 : i32
    %c0_i32_0 = arith.constant 0 : i32
    return %c0_i32 : i32
  }
  func.func @transform_2(%arg0: i32) -> (i32, i32) {
    %c0_i32 = arith.constant 0 : i32
    %c0_i32_0 = arith.constant 0 : i32
    return %arg0, %c0_i32 : i32, i32
  }
  func.func @transform_3(%arg0: i32) -> (i32, i32) {
    %c0_i32 = arith.constant 0 : i32
    %c0_i32_0 = arith.constant 0 : i32
    %c0_i32_1 = arith.constant 0 : i32
    return %c0_i32, %c0_i32_0 : i32, i32
  }
  func.func @transform_4(%arg0: i32) -> (i32, i32) {
    %c0_i32 = arith.constant 0 : i32
    %c0_i32_0 = arith.constant 0 : i32
    return %arg0, %c0_i32 : i32, i32
  }
  func.func @transform_5(%arg0: i32) -> (i32, i32) {
    %c0_i32 = arith.constant 0 : i32
    %c0_i32_0 = arith.constant 0 : i32
    %c0_i32_1 = arith.constant 0 : i32
    return %c0_i32, %c0_i32_0 : i32, i32
  }
  func.func @transform_6(%arg0: i32) -> (i32, i32) {
    %c0_i32 = arith.constant 0 : i32
    %c0_i32_0 = arith.constant 0 : i32
    return %arg0, %c0_i32 : i32, i32
  }
}

</mosaic_0001>

<llo_original>
// kernel: tpu_custom_call.1
$region0: #{tpu_custom_call.1}
  #allocation0 [shape = 'u32[]', space=smem, size = 0x4, offset = 0x4, fixed_abs, tag = 'smem constant byte address 0x4 - core index']
  #allocation1 [shape = 'u32[144,128]{1,0:T(1,128)}', space=vmem, size = 0x12000, scoped, tag = 'internal scratch']
  %s0 = inlined_call_operand.hbm [shape: f32[2], index: 0, kind: input, shape index: {}]
  %s1 = inlined_call_operand.vmem [shape: s32[2], index: 1, kind: input, shape index: {}]
  %s2 = inlined_call_operand.hbm [shape: bf16[16,128], index: 2, kind: input, shape index: {}]
  %s3 = inlined_call_operand.hbm [shape: bf16[128,128], index: 3, kind: input, shape index: {}]
  %s4 = inlined_call_operand.vmem [shape: bf16[16,128], index: 4, kind: input, shape index: {}]
  %s5 = inlined_call_operand.hbm [shape: bf16[128,128], index: 5, kind: input, shape index: {}]
  %s6 = inlined_call_operand.hbm [shape: f32[8,128], index: 6, kind: output, shape index: {}]
  %s7 = sld [smem:[#allocation0]]
  $region54: #{tpu_custom_call.1} parent=0
    _
  %s9 = ssub.s32 1, %s7
  %s10 = scalar_select 0, %s9, %s7
  $region1: #{tpu_custom_call.1} parent=0
    #allocation2 [shape = 'u8[512]{0}', space=smem, size = 0x200, scoped, tag = 'input window, operand 0, single buffered']
    #allocation3 [shape = 's32[1]{0}', space=sflag, size = 0x4, scoped, tag = 'scoped memory for tpu_custom_call.1']
    #allocation4 [shape = 's32[1]{0}', space=sflag, size = 0x4, scoped, tag = 'scoped memory for tpu_custom_call.1']
    #allocation5 [shape = 's32[1]{0}', space=sflag, size = 0x4, scoped, tag = 'scoped memory for tpu_custom_call.1']
    #allocation6 [shape = 's32[1]{0}', space=sflag, size = 0x4, scoped, tag = 'scoped memory for tpu_custom_call.1']
    #allocation7 [shape = 'u8[512]{0}', space=smem, size = 0x200, scoped, tag = 'input window, operand 1, single buffered']
    #allocation8 [shape = 'u8[4096]{0}', space=vmem, size = 0x1000, scoped, tag = 'input window, operand 2, single buffered']
    #allocation9 [shape = 'u8[32768]{0}', space=vmem, size = 0x8000, scoped, tag = 'input window, operand 3, single buffered']
    #allocation10 [shape = 's32[1]{0}', space=sflag, size = 0x4, scoped, tag = 'scoped memory for tpu_custom_call.1']
    #allocation11 [shape = 'u8[32768]{0}', space=vmem, size = 0x8000, scoped, tag = 'input window, operand 5, single buffered']
    #allocation12 [shape = 'u8[4096]{0}', space=vmem, size = 0x1000, scoped, tag = 'output window, operand 0, single buffered']
    %11 = vsyncpa [#allocation5], 0
    %12 = vsyncpa [#allocation6], 0
    %13 = vsyncpa [#allocation3], 0
    %14 = vsyncpa [#allocation10], 0
    %15 = vsyncpa [#allocation4], 0
    // Predicated region
    $region2: #{tpu_custom_call.1} parent=1 // pred_check
      _
    $region3: #{tpu_custom_call.1} parent=1 // pred_check_branch
      %17 = sbr.rel (0) target = $region5
    $region4: #{tpu_custom_call.1} parent=1 // pred_region
      %s19 = ssub.s32 16, 16
      %20 = vsyncadd [#allocation5], %s19
      %23 = dma.hbm_to_smem %s0, 16, [#allocation2], [#allocation5]
    $region5: #{tpu_custom_call.1} parent=1 // pred_fallthru
      _
    // Predicated region
    $region6: #{tpu_custom_call.1} parent=1 // pred_check
      _
    $region7: #{tpu_custom_call.1} parent=1 // pred_check_branch
      %25 = sbr.rel (0) target = $region9
    $region8: #{tpu_custom_call.1} parent=1 // pred_region
      %s27 = ssub.s32 16, 16
      %28 = vsyncadd [#allocation6], %s27
      %s30 = sshll.u32 %s1, 4
      %s31 = int_to_ptr.vmem [resolvable:$true] %s30
      %33 = dma.vmem_to_smem %s31, 16, [#allocation7], [#allocation6]
    $region9: #{tpu_custom_call.1} parent=1 // pred_fallthru
      _
    // Predicated region
    $region10: #{tpu_custom_call.1} parent=1 // pred_check
      _
    $region11: #{tpu_custom_call.1} parent=1 // pred_check_branch
      %35 = sbr.rel (0) target = $region13
    $region12: #{tpu_custom_call.1} parent=1 // pred_region
      %s37 = ssub.s32 128, 128
      %38 = vsyncadd [#allocation3], %s37
      %s39 = sshll.u32 [#allocation8], 4
      %s40 = int_to_ptr.vmem [resolvable:$true] %s39
      %45 = dma.hbm_to_vmem [thread:$0]  %s2, 128, %s40, [#allocation3], 64, 64, 4
    $region13: #{tpu_custom_call.1} parent=1 // pred_fallthru
      _
    // Predicated region
    $region14: #{tpu_custom_call.1} parent=1 // pred_check
      _
    $region15: #{tpu_custom_call.1} parent=1 // pred_check_branch
      %47 = sbr.rel (0) target = $region17
    $region16: #{tpu_custom_call.1} parent=1 // pred_region
      %s49 = ssub.s32 1024, 1024
      %50 = vsyncadd [#allocation10], %s49
      %s51 = sshll.u32 [#allocation9], 4
      %s52 = int_to_ptr.vmem [resolvable:$true] %s51
      %57 = dma.hbm_to_vmem [thread:$0]  %s3, 1024, %s52, [#allocation10], 64, 64, 4
    $region17: #{tpu_custom_call.1} parent=1 // pred_fallthru
      _
    // Predicated region
    $region18: #{tpu_custom_call.1} parent=1 // pred_check
      _
    $region19: #{tpu_custom_call.1} parent=1 // pred_check_branch
      %59 = sbr.rel (0) target = $region21
    $region20: #{tpu_custom_call.1} parent=1 // pred_region
      _
    $region21: #{tpu_custom_call.1} parent=1 // pred_fallthru
      _
    // Predicated region
    $region22: #{tpu_custom_call.1} parent=1 // pred_check
      _
    $region23: #{tpu_custom_call.1} parent=1 // pred_check_branch
      %61 = sbr.rel (0) target = $region25
    $region24: #{tpu_custom_call.1} parent=1 // pred_region
      %s63 = ssub.s32 1024, 1024
      %64 = vsyncadd [#allocation10], %s63
      %s65 = sshll.u32 [#allocation11], 4
      %s66 = int_to_ptr.vmem [resolvable:$true] %s65
      %71 = dma.hbm_to_vmem [thread:$0]  %s5, 1024, %s66, [#allocation10], 64, 64, 4
    $region25: #{tpu_custom_call.1} parent=1 // pred_fallthru
      _
    // Predicated region
    $region26: #{tpu_custom_call.1} parent=1 // pred_check
      _
    $region27: #{tpu_custom_call.1} parent=1 // pred_check_branch
      %73 = sbr.rel (0) target = $region29
    $region28: #{tpu_custom_call.1} parent=1 // pred_region
      %74 = dma.done [#allocation5], 16
    $region29: #{tpu_custom_call.1} parent=1 // pred_fallthru
      _
    // Predicated region
    $region30: #{tpu_custom_call.1} parent=1 // pred_check
      _
    $region31: #{tpu_custom_call.1} parent=1 // pred_check_branch
      %76 = sbr.rel (0) target = $region33
    $region32: #{tpu_custom_call.1} parent=1 // pred_region
      %77 = dma.done [#allocation6], 16
    $region33: #{tpu_custom_call.1} parent=1 // pred_fallthru
      _
    // Predicated region
    $region34: #{tpu_custom_call.1} parent=1 // pred_check
      _
    $region35: #{tpu_custom_call.1} parent=1 // pred_check_branch
      %79 = sbr.rel (0) target = $region37
    $region36: #{tpu_custom_call.1} parent=1 // pred_region
      %80 = dma.done [#allocation3], 128
    $region37: #{tpu_custom_call.1} parent=1 // pred_fallthru
      _
    // Predicated region
    $region38: #{tpu_custom_call.1} parent=1 // pred_check
      _
    $region39: #{tpu_custom_call.1} parent=1 // pred_check_branch
      %82 = sbr.rel (0) target = $region41
    $region40: #{tpu_custom_call.1} parent=1 // pred_region
      %83 = dma.done [#allocation10], 1024
    $region41: #{tpu_custom_call.1} parent=1 // pred_fallthru
      _
    // Predicated region
    $region42: #{tpu_custom_call.1} parent=1 // pred_check
      _
    $region43: #{tpu_custom_call.1} parent=1 // pred_check_branch
      %85 = sbr.rel (0) target = $region45
    $region44: #{tpu_custom_call.1} parent=1 // pred_region
      %86 = dma.done [#allocation10], 1024
    $region45: #{tpu_custom_call.1} parent=1 // pred_fallthru
      _
    %87 = sfence
    %s89 = sld [smem:[#allocation2]]
    %s90 = sld [smem:[#allocation2 + $0x1]]
    %s91 = sld [smem:[#allocation7]]
    %s92 = sld [smem:[#allocation7 + $0x1]]
    %s93 = smul.u32 0, 16
    %v94 = vlaneseq
    %v95 = vshrl.u32 %v94, 7
    %v96 = vadd.s32 %v95, 8
    %v97 = vstv %s93
    %v98 = vadd.s32 %v97, %v95
    %v99 = vadd.s32 %v97, %v96
    %v100 = vstv %s91
    %vm101 = vcmp.lt.s32.totalorder %v98, %v100
    %vm102 = vcmp.lt.s32.totalorder %v99, %v100
    %v103 = vlaneseq
    %v104 = vand.u32 %v103, 127
    %v105 = vstv %s92
    %vm106 = vcmp.lt.s32.totalorder %v104, %v105
    %v107 = vsel %vm106, 0.0, -1e+30
    %v108 = vld [vmem:[#allocation8] sm:$0xf]
    %v109 = vld [vmem:[#allocation8 + $0x4] sm:$0xf]
    %v110 = vld [vmem:[#allocation9] sm:$0xf]
    %v111 = vld [vmem:[#allocation9 + $0x4] sm:$0xf]
    %v112 = vld [vmem:[#allocation9 + $0x8] sm:$0xf]
    %v113 = vld [vmem:[#allocation9 + $0xc] sm:$0xf]
    %v114 = vld [vmem:[#allocation9 + $0x10] sm:$0xf]
    %v115 = vld [vmem:[#allocation9 + $0x14] sm:$0xf]
    %v116 = vld [vmem:[#allocation9 + $0x18] sm:$0xf]
    %v117 = vld [vmem:[#allocation9 + $0x1c] sm:$0xf]
    %v118 = vld [vmem:[#allocation9 + $0x20] sm:$0xf]
    %v119 = vld [vmem:[#allocation9 + $0x24] sm:$0xf]
    %v120 = vld [vmem:[#allocation9 + $0x28] sm:$0xf]
    %v121 = vld [vmem:[#allocation9 + $0x2c] sm:$0xf]
    %v122 = vld [vmem:[#allocation9 + $0x30] sm:$0xf]
    %v123 = vld [vmem:[#allocation9 + $0x34] sm:$0xf]
    %v124 = vld [vmem:[#allocation9 + $0x38] sm:$0xf]
    %v125 = vld [vmem:[#allocation9 + $0x3c] sm:$0xf]
    %v128 = vunpack.c.l.b16 %v108
    %v129 = vunpack.c.l.b16 %v109
    %v130 = vpack.c.b16 %v129, %v128
    %v148 = vunpack.c.l.b16 %v110
    %v149 = vunpack.c.l.b16 %v111
    %v150 = vunpack.c.l.b16 %v112
    %v151 = vunpack.c.l.b16 %v113
    %v152 = vunpack.c.l.b16 %v114
    %v153 = vunpack.c.l.b16 %v115
    %v154 = vunpack.c.l.b16 %v116
    %v155 = vunpack.c.l.b16 %v117
    %v156 = vunpack.c.l.b16 %v118
    %v157 = vunpack.c.l.b16 %v119
    %v158 = vunpack.c.l.b16 %v120
    %v159 = vunpack.c.l.b16 %v121
    %v160 = vunpack.c.l.b16 %v122
    %v161 = vunpack.c.l.b16 %v123
    %v162 = vunpack.c.l.b16 %v124
    %v163 = vunpack.c.l.b16 %v125
    %v164 = vpack.c.b16 %v149, %v148
    %v165 = vpack.c.b16 %v151, %v150
    %v166 = vpack.c.b16 %v153, %v152
    %v167 = vpack.c.b16 %v155, %v154
    %v168 = vpack.c.b16 %v157, %v156
    %v169 = vpack.c.b16 %v159, %v158
    %v170 = vpack.c.b16 %v161, %v160
    %v171 = vpack.c.b16 %v163, %v162
    %180 = vmatprep.subr.bf16.mxu0 0
    %181 = vmatpush1.bf16.msra.mxu0 %v164
    %182 = vmatprep.subr.bf16.mxu0 0
    %183 = vmatpush1.bf16.msra.mxu0 %v165
    %184 = vmatprep.subr.bf16.mxu0 0
    %185 = vmatpush1.bf16.msra.mxu0 %v166
    %186 = vmatprep.subr.bf16.mxu0 0
    %187 = vmatpush1.bf16.msra.mxu0 %v167
    %188 = vmatprep.subr.bf16.mxu0 0
    %189 = vmatpush1.bf16.msra.mxu0 %v168
    %190 = vmatprep.subr.bf16.mxu0 0
    %191 = vmatpush1.bf16.msra.mxu0 %v169
    %192 = vmatprep.subr.bf16.mxu0 0
    %193 = vmatpush1.bf16.msra.mxu0 %v170
    %194 = vmatprep.subr.bf16.mxu0 0
    %195 = vmatpush1.bf16.msra.mxu0 %v171
    %196 = vmatprep.subr.bf16.mxu0 0
    %197 = vmatpush1.bf16.msra.mxu0 0
    %198 = vmatprep.subr.bf16.mxu0 0
    %199 = vmatpush1.bf16.msra.mxu0 0
    %200 = vmatprep.subr.bf16.mxu0 0
    %201 = vmatpush1.bf16.msra.mxu0 0
    %202 = vmatprep.subr.bf16.mxu0 0
    %203 = vmatpush1.bf16.msra.mxu0 0
    %204 = vmatprep.subr.bf16.mxu0 0
    %205 = vmatpush1.bf16.msra.mxu0 0
    %206 = vmatprep.subr.bf16.mxu0 0
    %207 = vmatpush1.bf16.msra.mxu0 0
    %208 = vmatprep.subr.bf16.mxu0 0
    %209 = vmatpush1.bf16.msra.mxu0 0
    %210 = vmatprep.subr.bf16.mxu0 0
    %211 = vmatpush1.bf16.msra.mxu0 0
    %212 = vmatprep.mubr.bf16.mxu0 0
    %213 = vmatmul.mubr.bf16.gmra.mrb[0].mxu0 %v130
    %v214 = vpop.f32.mrb[0].mxu0
    %v215 = vadd.f32 0.0, %v214
    %v216 = vpop.f32.mrb[0].mxu0
    %v217 = vpop.f32.mrb[0].mxu0
    %v218 = vadd.f32 0.0, %v217
    %v219 = vpop.f32.mrb[0].mxu0
    %220 = vdwg.mxu0
    %v221 = vld [vmem:[%s4] sm:$0xf]
    %v222 = vld [vmem:[%s4 + $0x4] sm:$0xf]
    %v223 = vld [vmem:[#allocation11] sm:$0xf]
    %v224 = vld [vmem:[#allocation11 + $0x4] sm:$0xf]
    %v225 = vld [vmem:[#allocation11 + $0x8] sm:$0xf]
    %v226 = vld [vmem:[#allocation11 + $0xc] sm:$0xf]
    %v227 = vld [vmem:[#allocation11 + $0x10] sm:$0xf]
    %v228 = vld [vmem:[#allocation11 + $0x14] sm:$0xf]
    %v229 = vld [vmem:[#allocation11 + $0x18] sm:$0xf]
    %v230 = vld [vmem:[#allocation11 + $0x1c] sm:$0xf]
    %v231 = vld [vmem:[#allocation11 + $0x20] sm:$0xf]
    %v232 = vld [vmem:[#allocation11 + $0x24] sm:$0xf]
    %v233 = vld [vmem:[#allocation11 + $0x28] sm:$0xf]
    %v234 = vld [vmem:[#allocation11 + $0x2c] sm:$0xf]
    %v235 = vld [vmem:[#allocation11 + $0x30] sm:$0xf]
    %v236 = vld [vmem:[#allocation11 + $0x34] sm:$0xf]
    %v237 = vld [vmem:[#allocation11 + $0x38] sm:$0xf]
    %v238 = vld [vmem:[#allocation11 + $0x3c] sm:$0xf]
    %v239 = vadd.f32 %v215, %v107
    %v240 = vadd.f32 %v218, %v107
    %v243 = vunpack.c.l.b16 %v221
    %v244 = vunpack.c.l.b16 %v222
    %v245 = vpack.c.b16 %v244, %v243
    %v263 = vunpack.c.l.b16 %v223
    %v264 = vunpack.c.l.b16 %v224
    %v265 = vunpack.c.l.b16 %v225
    %v266 = vunpack.c.l.b16 %v226
    %v267 = vunpack.c.l.b16 %v227
    %v268 = vunpack.c.l.b16 %v228
    %v269 = vunpack.c.l.b16 %v229
    %v270 = vunpack.c.l.b16 %v230
    %v271 = vunpack.c.l.b16 %v231
    %v272 = vunpack.c.l.b16 %v232
    %v273 = vunpack.c.l.b16 %v233
    %v274 = vunpack.c.l.b16 %v234
    %v275 = vunpack.c.l.b16 %v235
    %v276 = vunpack.c.l.b16 %v236
    %v277 = vunpack.c.l.b16 %v237
    %v278 = vunpack.c.l.b16 %v238
    %v279 = vpack.c.b16 %v264, %v263
    %v280 = vpack.c.b16 %v266, %v265
    %v281 = vpack.c.b16 %v268, %v267
    %v282 = vpack.c.b16 %v270, %v269
    %v283 = vpack.c.b16 %v272, %v271
    %v284 = vpack.c.b16 %v274, %v273
    %v285 = vpack.c.b16 %v276, %v275
    %v286 = vpack.c.b16 %v278, %v277
    %295 = vmatprep.subr.bf16.mxu0 0
    %296 = vmatpush1.bf16.msra.mxu0 %v279
    %297 = vmatprep.subr.bf16.mxu0 0
    %298 = vmatpush1.bf16.msra.mxu0 %v280
    %299 = vmatprep.subr.bf16.mxu0 0
    %300 = vmatpush1.bf16.msra.mxu0 %v281
    %301 = vmatprep.subr.bf16.mxu0 0
    %302 = vmatpush1.bf16.msra.mxu0 %v282
    %303 = vmatprep.subr.bf16.mxu0 0
    %304 = vmatpush1.bf16.msra.mxu0 %v283
    %305 = vmatprep.subr.bf16.mxu0 0
    %306 = vmatpush1.bf16.msra.mxu0 %v284
    %307 = vmatprep.subr.bf16.mxu0 0
    %308 = vmatpush1.bf16.msra.mxu0 %v285
    %309 = vmatprep.subr.bf16.mxu0 0
    %310 = vmatpush1.bf16.msra.mxu0 %v286
    %311 = vmatprep.subr.bf16.mxu0 0
    %312 = vmatpush1.bf16.msra.mxu0 0
    %313 = vmatprep.subr.bf16.mxu0 0
    %314 = vmatpush1.bf16.msra.mxu0 0
    %315 = vmatprep.subr.bf16.mxu0 0
    %316 = vmatpush1.bf16.msra.mxu0 0
    %317 = vmatprep.subr.bf16.mxu0 0
    %318 = vmatpush1.bf16.msra.mxu0 0
    %319 = vmatprep.subr.bf16.mxu0 0
    %320 = vmatpush1.bf16.msra.mxu0 0
    %321 = vmatprep.subr.bf16.mxu0 0
    %322 = vmatpush1.bf16.msra.mxu0 0
    %323 = vmatprep.subr.bf16.mxu0 0
    %324 = vmatpush1.bf16.msra.mxu0 0
    %325 = vmatprep.subr.bf16.mxu0 0
    %326 = vmatpush1.bf16.msra.mxu0 0
    %327 = vmatprep.mubr.bf16.mxu0 0
    %328 = vmatmul.mubr.bf16.gmra.mrb[0].mxu0 %v245
    %v329 = vpop.f32.mrb[0].mxu0
    %v330 = vadd.f32 %v107, %v329
    %v331 = vpop.f32.mrb[0].mxu0
    %v332 = vpop.f32.mrb[0].mxu0
    %v333 = vadd.f32 %v107, %v332
    %v334 = vpop.f32.mrb[0].mxu0
    %335 = vdwg.mxu0
    %336 = vmax.xlane.f32.xlu0 %v239
    %v337 = vpop.xlane.xlu0 %336
    %338 = vmax.xlane.f32.xlu0 %v240
    %v339 = vpop.xlane.xlu0 %338
    %v340 = vsub.f32 %v239, %v337
    %v341 = vsub.f32 %v240, %v339
    %v342 = vmul.f32 %v340, 1.442695
    %v343 = vpow.pop %v342
    %v344 = vmul.f32 %v341, 1.442695
    %v345 = vpow.pop %v344
    %346 = vadd.xlane.f32.xlu0 %v343
    %v347 = vpop.xlane.xlu0 %346
    %348 = vadd.xlane.f32.xlu0 %v345
    %v349 = vpop.xlane.xlu0 %348
    %v350 = vlog2.pop %v347
    %v351 = vmul.f32 %v350, 0.6931472
    %v352 = vlog2.pop %v349
    %v353 = vmul.f32 %v352, 0.6931472
    %v354 = vadd.f32 %v337, %v351
    %v355 = vadd.f32 %v339, %v353
    %356 = vmax.xlane.f32.xlu0 %v330
    %v357 = vpop.xlane.xlu0 %356
    %358 = vmax.xlane.f32.xlu0 %v333
    %v359 = vpop.xlane.xlu0 %358
    %v360 = vsub.f32 %v330, %v357
    %v361 = vsub.f32 %v333, %v359
    %v362 = vmul.f32 %v360, 1.442695
    %v363 = vpow.pop %v362
    %v364 = vmul.f32 %v361, 1.442695
    %v365 = vpow.pop %v364
    %366 = vadd.xlane.f32.xlu0 %v363
    %v367 = vpop.xlane.xlu0 %366
    %368 = vadd.xlane.f32.xlu0 %v365
    %v369 = vpop.xlane.xlu0 %368
    %v370 = vmul.f32 %v363, %v215
    %v371 = vmul.f32 %v365, %v218
    %372 = vadd.xlane.f32.xlu0 %v370
    %v373 = vpop.xlane.xlu0 %372
    %374 = vadd.xlane.f32.xlu0 %v371
    %v375 = vpop.xlane.xlu0 %374
    %v376 = vmax.f32 %v367, 1e-37
    %v377 = vmax.f32 %v369, 1e-37
    %v378 = vrcp.pop %v376
    %v379 = vmul.f32 %v373, %v378
    %v380 = vrcp.pop %v377
    %v381 = vmul.f32 %v375, %v380
    %v382 = vsub.f32 %v354, %v379
    %v383 = vsub.f32 %v355, %v381
    %v384 = vsel %vm101, %v382, 0.0
    %v385 = vsel %vm102, %v383, 0.0
    %v386 = vadd.f32 %v384, %v385
    %v387 = vrot.slane %v386, 4
    %v388 = vadd.f32 %v386, %v387
    %v389 = vrot.slane %v388, 2
    %v390 = vadd.f32 %v388, %v389
    %v391 = vrot.slane %v390, 1
    %v392 = vadd.f32 %v390, %v391
    %v393 = vsel %vm101, 1, 0
    %v394 = vsel %vm102, 1, 0
    %v395 = vcvt.s32.f32 %v393
    %v396 = vcvt.s32.f32 %v394
    %v397 = vstv %s89
    %v398 = vsub.f32 %v337, %v397
    %v399 = vsub.f32 %v339, %v397
    %v400 = vmul.f32 %v398, 1.442695
    %v401 = vpow.pop %v400
    %v402 = vmul.f32 %v399, 1.442695
    %v403 = vpow.pop %v402
    %v404 = vmul.f32 %v401, %v395
    %v405 = vmul.f32 %v403, %v396
    %v406 = vstv %s90
    %v407 = vsub.f32 %v357, %v406
    %v408 = vsub.f32 %v359, %v406
    %v409 = vmul.f32 %v407, 1.442695
    %v410 = vpow.pop %v409
    %v411 = vmul.f32 %v408, 1.442695
    %v412 = vpow.pop %v411
    %v413 = vmul.f32 %v410, %v395
    %v414 = vmul.f32 %v412, %v396
    %v415 = vmul.f32 %v343, %v404
    %v416 = vmul.f32 %v345, %v405
    %v417 = vadd.f32 %v415, %v416
    %v418 = vrot.slane %v417, 4
    %v419 = vadd.f32 %v417, %v418
    %v420 = vrot.slane %v419, 2
    %v421 = vadd.f32 %v419, %v420
    %v422 = vrot.slane %v421, 1
    %v423 = vadd.f32 %v421, %v422
    %v424 = vmul.f32 %v363, %v413
    %v425 = vmul.f32 %v365, %v414
    %v426 = vadd.f32 %v424, %v425
    %v427 = vrot.slane %v426, 4
    %v428 = vadd.f32 %v426, %v427
    %v429 = vrot.slane %v428, 2
    %v430 = vadd.f32 %v428, %v429
    %v431 = vrot.slane %v430, 1
    %v432 = vadd.f32 %v430, %v431
    %v433 = vmul.f32 %v370, %v413
    %v434 = vmul.f32 %v371, %v414
    %v435 = vadd.f32 %v433, %v434
    %v436 = vrot.slane %v435, 4
    %v437 = vadd.f32 %v435, %v436
    %v438 = vrot.slane %v437, 2
    %v439 = vadd.f32 %v437, %v438
    %v440 = vrot.slane %v439, 1
    %v441 = vadd.f32 %v439, %v440
    %442 = vst [vmem:[#allocation12] sm:$0x1] %v423
    %443 = vst [vmem:[#allocation12 + $0x1] sm:$0x1] %v432
    %444 = vst [vmem:[#allocation12 + $0x2] sm:$0x1] %v441
    %445 = vst [vmem:[#allocation12 + $0x3] sm:$0x1] %v392
    %446 = vst [vmem:[#allocation12 + $0x4] sm:$0xf] 0.0
    // Predicated region
    $region46: #{tpu_custom_call.1} parent=1 // pred_check
      _
    $region47: #{tpu_custom_call.1} parent=1 // pred_check_branch
      %448 = sbr.rel (0) target = $region49
    $region48: #{tpu_custom_call.1} parent=1 // pred_region
      %s450 = ssub.s32 128, 128
      %451 = vsyncadd [#allocation4], %s450
      %s453 = sshll.u32 [#allocation12], 4
      %s454 = int_to_ptr.vmem [resolvable:$true] %s453
      %456 = dma.vmem_to_hbm [thread:$0]  %s454, 128, %s6, [#allocation4]
    $region49: #{tpu_custom_call.1} parent=1 // pred_fallthru
      _
    // Predicated region
    $region50: #{tpu_custom_call.1} parent=1 // pred_check
      _
    $region51: #{tpu_custom_call.1} parent=1 // pred_check_branch
      %458 = sbr.rel (0) target = $region53
    $region52: #{tpu_custom_call.1} parent=1 // pred_region
      %459 = dma.done [#allocation4], 128
    $region53: #{tpu_custom_call.1} parent=1 // pred_fallthru
      _
    %460 = vsyncpa [#allocation3], 1
    %461 = vsyncpa [#allocation10], 1
    %462 = vsyncpa [#allocation4], 1
    %463 = vsyncpa [#allocation5], 1
    %464 = vsyncpa [#allocation6], 1

</llo_original>
